<compile_context>
chip_gen: v7x
topology: tpu7x:2x2x1
jax: 0.10.0
libtpu: 0.0.40
codegen_flags: <defaults>
</compile_context>

<pallas_src>
import functools

import jax
import jax.numpy as jnp
from jax import lax
from jax.experimental import pallas as pl
from jax.experimental.pallas import tpu as pltpu


def _cdiv(a, b):
    return -(-a // b)


def _round_up(v, m):
    return ((v + m - 1) // m) * m


def _pad2(a, rows, cols):
    r, c = a.shape
    return jnp.pad(a, ((0, rows - r), (0, cols - c)))


def _choose_batch_tiling(B, max_tile=4096, min_grid=2):
    """Pick (batch_tile, num_tiles). Grid length >= min_grid (v7x megacore)."""
    num_tiles = max(min_grid, _cdiv(B, max_tile))
    tile = _round_up(max(_cdiv(B, num_tiles), 8), 8)
    return tile, num_tiles


def msnet_kernel(x_ref, w1_ref, b1_ref, w2_ref, b2_ref,
                 w3_ref, b3_ref, w4_ref, b4_ref, o_ref):
    mm_dtype = w1_ref.dtype

    # x arrives unpadded in f32; cast to matmul dtype in VMEM (no extra HBM
    # pad/convert pass in the wrapper).
    x = x_ref[...].astype(mm_dtype)

    # encoder: Linear -> ReLU -> (Dropout: identity) -> Linear -> ReLU -> (Dropout)
    h = jnp.dot(x, w1_ref[...], preferred_element_type=jnp.float32) + b1_ref[...]
    h = jnp.maximum(h, 0.0)
    h = jnp.dot(h.astype(mm_dtype), w2_ref[...],
                preferred_element_type=jnp.float32) + b2_ref[...]
    h = jnp.maximum(h, 0.0)

    # head: Linear -> ReLU -> Linear
    h = jnp.dot(h.astype(mm_dtype), w3_ref[...],
                preferred_element_type=jnp.float32) + b3_ref[...]
    h = jnp.maximum(h, 0.0)
    z = jnp.dot(h.astype(mm_dtype), w4_ref[...],
                preferred_element_type=jnp.float32) + b4_ref[...]

    # F.normalize(z, dim=1) == z / max(||z||_2, 1e-12).
    # rsqrt is a single EUP op; max(sumsq, 1e-24) <=> clamping the norm at 1e-12.
    # Padded output columns are exactly zero -> they don't affect the norm.
    sumsq = jnp.sum(z * z, axis=1, keepdims=True)
    inv = lax.rsqrt(jnp.maximum(sumsq, 1e-24))
    o_ref[...] = (z * inv).astype(o_ref.dtype)


def prepare_params(params, matmul_dtype=jnp.bfloat16):
    """Pad weights/biases to lane-dense (x128) shapes and cast ONCE.

    Done outside the per-call path so the per-call jit contains no tiny
    pad/convert fusions.  Returns (padded_param_tuple, n_head2).
    """
    (w1, b1), (w2, b2), (w3, b3), (w4, b4) = params
    n_input = w1.shape[0]
    nlp = _round_up(w1.shape[1], 128)
    h1p = _round_up(w2.shape[1], 128)
    h2p = _round_up(w4.shape[1], 128)
    padded = (
        _pad2(w1, n_input, nlp).astype(matmul_dtype),
        _pad2(b1.reshape(1, -1), 1, nlp).astype(jnp.float32),
        _pad2(w2, nlp, h1p).astype(matmul_dtype),
        _pad2(b2.reshape(1, -1), 1, h1p).astype(jnp.float32),
        _pad2(w3, h1p, h1p).astype(matmul_dtype),
        _pad2(b3.reshape(1, -1), 1, h1p).astype(jnp.float32),
        _pad2(w4, h1p, h2p).astype(matmul_dtype),
        _pad2(b4.reshape(1, -1), 1, h2p).astype(jnp.float32),
    )
    return padded, int(w4.shape[1])


@functools.partial(jax.jit,
                   static_argnames=("n_head2", "out_dtype", "max_batch_tile"))
def msnet_forward_padded(x, padded_params, *, n_head2,
                         out_dtype=jnp.bfloat16, max_batch_tile=4096):
    w1p, b1p, w2p, b2p, w3p, b3p, w4p, b4p = padded_params
    B, n_input = x.shape
    nlp = w1p.shape[1]
    h1p = w2p.shape[1]
    h2p = w4p.shape[1]

    tile, num_tiles = _choose_batch_tiling(B, max_tile=max_batch_tile)
    Bp = tile * num_tiles
    xp = jnp.pad(x, ((0, Bp - B), (0, 0))) if Bp != B else x

    mm_bytes = jnp.dtype(w1p.dtype).itemsize
    w_elems = n_input * nlp + nlp * h1p + h1p * h1p + h1p * h2p
    flops = 2 * Bp * w_elems
    bytes_accessed = (
        Bp * n_input * x.dtype.itemsize                 # streamed x (f32, unpadded)
        + Bp * h2p * jnp.dtype(out_dtype).itemsize      # streamed output
        + w_elems * mm_bytes                            # resident weights
        + (nlp + 2 * h1p + h2p) * 4                     # biases (f32)
    )
    cost = pl.CostEstimate(flops=flops, transcendentals=Bp,
                           bytes_accessed=bytes_accessed)

    full = lambda shape: pl.BlockSpec(shape, lambda i: (0, 0))

    out = pl.pallas_call(
        msnet_kernel,
        out_shape=jax.ShapeDtypeStruct((Bp, h2p), out_dtype),
        grid_spec=pltpu.PrefetchScalarGridSpec(
            num_scalar_prefetch=0,
            grid=(num_tiles,),
            in_specs=[
                pl.BlockSpec((tile, n_input), lambda i: (i, 0)),  # x, unpadded feats
                full((n_input, nlp)), full((1, nlp)),
                full((nlp, h1p)), full((1, h1p)),
                full((h1p, h1p)), full((1, h1p)),
                full((h1p, h2p)), full((1, h2p)),
            ],
            out_specs=pl.BlockSpec((tile, h2p), lambda i: (i, 0)),
        ),
        compiler_params=pltpu.CompilerParams(
            dimension_semantics=("parallel",)),
        cost_estimate=cost,
    )(xp, w1p, b1p, w2p, b2p, w3p, b3p, w4p, b4p)

    return out[:B, :n_head2]


def msnet_forward(x, params, *, matmul_dtype=jnp.bfloat16,
                  out_dtype=jnp.bfloat16, max_batch_tile=4096):
    """Convenience wrapper: pad/cast params then run the Pallas forward."""
    padded, n_head2 = prepare_params(params, matmul_dtype)
    return msnet_forward_padded(x, padded, n_head2=n_head2,
                                out_dtype=out_dtype,
                                max_batch_tile=max_batch_tile)


def msnet_reference(x, params):
    """Pure-JAX f32 reference (eval-mode Dropout = identity)."""
    (w1, b1), (w2, b2), (w3, b3), (w4, b4) = params
    h = jnp.maximum(x @ w1 + b1, 0.0)
    h = jnp.maximum(h @ w2 + b2, 0.0)
    h = jnp.maximum(h @ w3 + b3, 0.0)
    z = h @ w4 + b4
    norm = jnp.sqrt(jnp.sum(z * z, axis=1, keepdims=True))
    return z / jnp.maximum(norm, 1e-12)


def init_params(key, n_input, n_latent, n_head1, n_head2):
    """Deterministic synthetic init (PyTorch-style uniform fan-in scaling)."""
    def linear(key, fan_in, fan_out):
        kw, kb = jax.random.split(key)
        bound = 1.0 / jnp.sqrt(float(fan_in))
        w = jax.random.uniform(kw, (fan_in, fan_out), jnp.float32, -bound, bound)
        b = jax.random.uniform(kb, (1, fan_out), jnp.float32, -bound, bound)
        return w, b

    k1, k2, k3, k4 = jax.random.split(key, 4)
    return (
        linear(k1, n_input, n_latent),
        linear(k2, n_latent, n_head1),
        linear(k3, n_head1, n_head1),
        linear(k4, n_head1, n_head2),
    )


if __name__ == "__main__":
    # Small shapes consistent with MSNet(n_input, n_latent, n_head1, n_head2)
    B, n_input, n_latent, n_head1, n_head2 = 64, 32, 64, 32, 16

    key = jax.random.PRNGKey(0)
    kx, kp = jax.random.split(key)
    x = jax.random.normal(kx, (B, n_input), dtype=jnp.float32)
    params = init_params(kp, n_input, n_latent, n_head1, n_head2)

    # Pad/cast weights once (outside the per-call path), then run the kernel.
    padded_params, nh2 = prepare_params(params)
    out = msnet_forward_padded(x, padded_params, n_head2=nh2)
    out = jax.block_until_ready(out)

    assert out.shape == (B, n_head2)

    out_f32 = out.astype(jnp.float32)

    # sanity 1: rows are unit-norm (F.normalize along dim=1; bf16 output store
    # adds ~2^-9 relative rounding, hence the 1e-2 tolerance).
    row_norms = jnp.linalg.norm(out_f32, axis=1)
    assert bool(jnp.all(jnp.abs(row_norms - 1.0) < 1e-2))

    # sanity 2: matches the pure-JAX f32 reference (loose tol: bf16 matmuls/out)
    ref = msnet_reference(x, params)
    assert bool(jnp.max(jnp.abs(out_f32 - ref)) < 5e-2)

    print("KERNEL_OK")
</pallas_src>

<mosaic_0001>
module attributes {stable_mosaic.version = 11 : i64} {
  func.func @msnet_kernel(%arg0: i32, %arg1: memref<32x32xf32, #tpu.memory_space<vmem>>, %arg2: memref<32x128xbf16, #tpu.memory_space<vmem>>, %arg3: memref<1x128xf32, #tpu.memory_space<vmem>>, %arg4: memref<128x128xbf16, #tpu.memory_space<vmem>>, %arg5: memref<1x128xf32, #tpu.memory_space<vmem>>, %arg6: memref<128x128xbf16, #tpu.memory_space<vmem>>, %arg7: memref<1x128xf32, #tpu.memory_space<vmem>>, %arg8: memref<128x128xbf16, #tpu.memory_space<vmem>>, %arg9: memref<1x128xf32, #tpu.memory_space<vmem>>, %arg10: memref<32x128xbf16, #tpu.memory_space<vmem>>) attributes {dimension_semantics = [#tpu.dimension_semantics<parallel>], iteration_bounds = array<i64: 2>, scalar_prefetch = 0 : i64, scratch_operands = 0 : i64, tpu.core_type = #tpu.core_type<tc>, window_params = [{transform_indices = @transform_0, window_bounds = array<i64: 32, 32>}, {pipeline_mode = #tpu.pipeline_mode<synchronous>, transform_indices = @transform_1, window_bounds = array<i64: 32, 128>}, {pipeline_mode = #tpu.pipeline_mode<synchronous>, transform_indices = @transform_2, window_bounds = array<i64: 1, 128>}, {pipeline_mode = #tpu.pipeline_mode<synchronous>, transform_indices = @transform_3, window_bounds = array<i64: 128, 128>}, {pipeline_mode = #tpu.pipeline_mode<synchronous>, transform_indices = @transform_4, window_bounds = array<i64: 1, 128>}, {pipeline_mode = #tpu.pipeline_mode<synchronous>, transform_indices = @transform_5, window_bounds = array<i64: 128, 128>}, {pipeline_mode = #tpu.pipeline_mode<synchronous>, transform_indices = @transform_6, window_bounds = array<i64: 1, 128>}, {pipeline_mode = #tpu.pipeline_mode<synchronous>, transform_indices = @transform_7, window_bounds = array<i64: 128, 128>}, {pipeline_mode = #tpu.pipeline_mode<synchronous>, transform_indices = @transform_8, window_bounds = array<i64: 1, 128>}, {transform_indices = @transform_9, window_bounds = array<i64: 32, 128>}]} {
    %c0 = arith.constant 0 : index
    %c0_0 = arith.constant 0 : index
    %0 = vector.load %arg1[%c0, %c0_0] : memref<32x32xf32, #tpu.memory_space<vmem>>, vector<32x32xf32>
    %1 = arith.truncf %0 : vector<32x32xf32> to vector<32x32xbf16>
    %c0_1 = arith.constant 0 : index
    %c0_2 = arith.constant 0 : index
    %2 = vector.load %arg2[%c0_1, %c0_2] : memref<32x128xbf16, #tpu.memory_space<vmem>>, vector<32x128xbf16>
    %cst = arith.constant dense<0.000000e+00> : vector<32x128xf32>
    %3 = tpu.matmul %1, %2, %cst {dimension_numbers = #tpu.dot_dimension_numbers<[1], [0], [0], [1], [0, 0, 1, 1], [], []>} : vector<32x32xbf16>, vector<32x128xbf16>, vector<32x128xf32> -> vector<32x128xf32>
    %c0_3 = arith.constant 0 : index
    %c0_4 = arith.constant 0 : index
    %4 = vector.load %arg3[%c0_3, %c0_4] : memref<1x128xf32, #tpu.memory_space<vmem>>, vector<1x128xf32>
    %5 = vector.broadcast %4 : vector<1x128xf32> to vector<32x128xf32>
    %6 = arith.addf %3, %5 : vector<32x128xf32>
    %cst_5 = arith.constant 0.000000e+00 : f32
    %7 = vector.broadcast %cst_5 : f32 to vector<32x128xf32>
    %8 = arith.maximumf %6, %7 : vector<32x128xf32>
    %9 = arith.truncf %8 : vector<32x128xf32> to vector<32x128xbf16>
    %c0_6 = arith.constant 0 : index
    %c0_7 = arith.constant 0 : index
    %10 = vector.load %arg4[%c0_6, %c0_7] : memref<128x128xbf16, #tpu.memory_space<vmem>>, vector<128x128xbf16>
    %cst_8 = arith.constant dense<0.000000e+00> : vector<32x128xf32>
    %11 = tpu.matmul %9, %10, %cst_8 {dimension_numbers = #tpu.dot_dimension_numbers<[1], [0], [0], [1], [0, 0, 1, 1], [], []>} : vector<32x128xbf16>, vector<128x128xbf16>, vector<32x128xf32> -> vector<32x128xf32>
    %c0_9 = arith.constant 0 : index
    %c0_10 = arith.constant 0 : index
    %12 = vector.load %arg5[%c0_9, %c0_10] : memref<1x128xf32, #tpu.memory_space<vmem>>, vector<1x128xf32>
    %13 = vector.broadcast %12 : vector<1x128xf32> to vector<32x128xf32>
    %14 = arith.addf %11, %13 : vector<32x128xf32>
    %cst_11 = arith.constant 0.000000e+00 : f32
    %15 = vector.broadcast %cst_11 : f32 to vector<32x128xf32>
    %16 = arith.maximumf %14, %15 : vector<32x128xf32>
    %17 = arith.truncf %16 : vector<32x128xf32> to vector<32x128xbf16>
    %c0_12 = arith.constant 0 : index
    %c0_13 = arith.constant 0 : index
    %18 = vector.load %arg6[%c0_12, %c0_13] : memref<128x128xbf16, #tpu.memory_space<vmem>>, vector<128x128xbf16>
    %cst_14 = arith.constant dense<0.000000e+00> : vector<32x128xf32>
    %19 = tpu.matmul %17, %18, %cst_14 {dimension_numbers = #tpu.dot_dimension_numbers<[1], [0], [0], [1], [0, 0, 1, 1], [], []>} : vector<32x128xbf16>, vector<128x128xbf16>, vector<32x128xf32> -> vector<32x128xf32>
    %c0_15 = arith.constant 0 : index
    %c0_16 = arith.constant 0 : index
    %20 = vector.load %arg7[%c0_15, %c0_16] : memref<1x128xf32, #tpu.memory_space<vmem>>, vector<1x128xf32>
    %21 = vector.broadcast %20 : vector<1x128xf32> to vector<32x128xf32>
    %22 = arith.addf %19, %21 : vector<32x128xf32>
    %cst_17 = arith.constant 0.000000e+00 : f32
    %23 = vector.broadcast %cst_17 : f32 to vector<32x128xf32>
    %24 = arith.maximumf %22, %23 : vector<32x128xf32>
    %25 = arith.truncf %24 : vector<32x128xf32> to vector<32x128xbf16>
    %c0_18 = arith.constant 0 : index
    %c0_19 = arith.constant 0 : index
    %26 = vector.load %arg8[%c0_18, %c0_19] : memref<128x128xbf16, #tpu.memory_space<vmem>>, vector<128x128xbf16>
    %cst_20 = arith.constant dense<0.000000e+00> : vector<32x128xf32>
    %27 = tpu.matmul %25, %26, %cst_20 {dimension_numbers = #tpu.dot_dimension_numbers<[1], [0], [0], [1], [0, 0, 1, 1], [], []>} : vector<32x128xbf16>, vector<128x128xbf16>, vector<32x128xf32> -> vector<32x128xf32>
    %c0_21 = arith.constant 0 : index
    %c0_22 = arith.constant 0 : index
    %28 = vector.load %arg9[%c0_21, %c0_22] : memref<1x128xf32, #tpu.memory_space<vmem>>, vector<1x128xf32>
    %29 = vector.broadcast %28 : vector<1x128xf32> to vector<32x128xf32>
    %30 = arith.addf %27, %29 : vector<32x128xf32>
    %31 = arith.mulf %30, %30 : vector<32x128xf32>
    %cst_23 = arith.constant dense<0.000000e+00> : vector<32xf32>
    %32 = vector.multi_reduction <add>, %31, %cst_23 [1] : vector<32x128xf32> to vector<32xf32>
    %33 = vector.shape_cast %32 : vector<32xf32> to vector<32x1xf32>
    %cst_24 = arith.constant 1.000000e-24 : f32
    %34 = vector.broadcast %cst_24 : f32 to vector<32x1xf32>
    %35 = arith.maximumf %33, %34 : vector<32x1xf32>
    %36 = math.rsqrt %35 : vector<32x1xf32>
    %37 = vector.broadcast %36 : vector<32x1xf32> to vector<32x128xf32>
    %38 = arith.mulf %30, %37 : vector<32x128xf32>
    %39 = arith.truncf %38 : vector<32x128xf32> to vector<32x128xbf16>
    %c0_25 = arith.constant 0 : index
    %c0_26 = arith.constant 0 : index
    %40 = vector.load %arg10[%c0_25, %c0_26] : memref<32x128xbf16, #tpu.memory_space<vmem>>, vector<32x128xbf16>
    tpu.vector_store %arg10[%c0_25, %c0_26], %39 {strides = array<i32>} : memref<32x128xbf16, #tpu.memory_space<vmem>>, vector<32x128xbf16>,
    return
  }
  func.func @transform_0(%arg0: i32) -> (i32, i32) {
    %c0_i32 = arith.constant 0 : i32
    %c0_i32_0 = arith.constant 0 : i32
    return %arg0, %c0_i32 : i32, i32
  }
  func.func @transform_1(%arg0: i32) -> (i32, i32) {
    %c0_i32 = arith.constant 0 : i32
    %c0_i32_0 = arith.constant 0 : i32
    %c0_i32_1 = arith.constant 0 : i32
    return %c0_i32, %c0_i32_0 : i32, i32
  }
  func.func @transform_2(%arg0: i32) -> (i32, i32) {
    %c0_i32 = arith.constant 0 : i32
    %c0_i32_0 = arith.constant 0 : i32
    %c0_i32_1 = arith.constant 0 : i32
    return %c0_i32, %c0_i32_0 : i32, i32
  }
  func.func @transform_3(%arg0: i32) -> (i32, i32) {
    %c0_i32 = arith.constant 0 : i32
    %c0_i32_0 = arith.constant 0 : i32
    %c0_i32_1 = arith.constant 0 : i32
    return %c0_i32, %c0_i32_0 : i32, i32
  }
  func.func @transform_4(%arg0: i32) -> (i32, i32) {
    %c0_i32 = arith.constant 0 : i32
    %c0_i32_0 = arith.constant 0 : i32
    %c0_i32_1 = arith.constant 0 : i32
    return %c0_i32, %c0_i32_0 : i32, i32
  }
  func.func @transform_5(%arg0: i32) -> (i32, i32) {
    %c0_i32 = arith.constant 0 : i32
    %c0_i32_0 = arith.constant 0 : i32
    %c0_i32_1 = arith.constant 0 : i32
    return %c0_i32, %c0_i32_0 : i32, i32
  }
  func.func @transform_6(%arg0: i32) -> (i32, i32) {
    %c0_i32 = arith.constant 0 : i32
    %c0_i32_0 = arith.constant 0 : i32
    %c0_i32_1 = arith.constant 0 : i32
    return %c0_i32, %c0_i32_0 : i32, i32
  }
  func.func @transform_7(%arg0: i32) -> (i32, i32) {
    %c0_i32 = arith.constant 0 : i32
    %c0_i32_0 = arith.constant 0 : i32
    %c0_i32_1 = arith.constant 0 : i32
    return %c0_i32, %c0_i32_0 : i32, i32
  }
  func.func @transform_8(%arg0: i32) -> (i32, i32) {
    %c0_i32 = arith.constant 0 : i32
    %c0_i32_0 = arith.constant 0 : i32
    %c0_i32_1 = arith.constant 0 : i32
    return %c0_i32, %c0_i32_0 : i32, i32
  }
  func.func @transform_9(%arg0: i32) -> (i32, i32) {
    %c0_i32 = arith.constant 0 : i32
    %c0_i32_0 = arith.constant 0 : i32
    return %arg0, %c0_i32 : i32, i32
  }
}

</mosaic_0001>

<llo_original>
// kernel: msnet_forward_padded.1
$region0: #{msnet_forward_padded.1}
  #allocation0 [shape = 'u32[]', space=smem, size = 0x4, offset = 0x4, fixed_abs, tag = 'smem constant byte address 0x4 - core index']
  #allocation1 [shape = 'u32[144,128]{1,0:T(1,128)}', space=vmem, size = 0x12000, scoped, tag = 'internal scratch']
  %s0 = inlined_call_operand.vmem [shape: f32[64,32], index: 0, kind: input, shape index: {}]
  %s1 = inlined_call_operand.vmem [shape: bf16[32,128], index: 1, kind: input, shape index: {}]
  %s2 = inlined_call_operand.vmem [shape: f32[1,128], index: 2, kind: input, shape index: {}]
  %s3 = inlined_call_operand.vmem [shape: bf16[128,128], index: 3, kind: input, shape index: {}]
  %s4 = inlined_call_operand.vmem [shape: f32[1,128], index: 4, kind: input, shape index: {}]
  %s5 = inlined_call_operand.hbm [shape: bf16[128,128], index: 5, kind: input, shape index: {}]
  %s6 = inlined_call_operand.vmem [shape: f32[1,128], index: 6, kind: input, shape index: {}]
  %s7 = inlined_call_operand.hbm [shape: bf16[128,128], index: 7, kind: input, shape index: {}]
  %s8 = inlined_call_operand.vmem [shape: f32[1,128], index: 8, kind: input, shape index: {}]
  %s9 = inlined_call_operand.vmem [shape: bf16[64,128], index: 9, kind: output, shape index: {}]
  %s10 = sld [smem:[#allocation0]]
  $region77: #{msnet_forward_padded.1} parent=0
    _
  %s12 = ssub.s32 1, %s10
  %s13 = scalar_select 0, %s12, %s10
  $region1: #{msnet_forward_padded.1} parent=0
    #allocation2 [shape = 'u8[32768]{0}', space=vmem, size = 0x8000, scoped, tag = 'input window, operand 5, single buffered']
    #allocation3 [shape = 's32[2]{0}', space=sflag, size = 0x8, scoped, tag = 'scoped memory for msnet_forward_padded.1']
    #allocation4 [shape = 'u8[32768]{0}', space=vmem, size = 0x8000, scoped, tag = 'input window, operand 7, single buffered']
    #allocation5 [shape = 's32[1]{0}', space=sflag, size = 0x4, scoped, tag = 'scoped memory for msnet_forward_padded.1']
    %14 = vsyncpa [#allocation3], 0
    %15 = vsyncpa [#allocation5], 0
    loop: start=0, step=1, limit=4
    $region2: #{msnet_forward_padded.1} parent=1 // loop_pre_header
      _
    $region3: #{msnet_forward_padded.1} parent=1 // loop_header
      %s17 = sphi 0, %s21
      %p18 = scmp.ge.s32.totalorder %s17, 4
      %s27 = sphi 0, %s29
      %s30 = sphi 0, %s27
      %s31 = sphi 0, %s30
      %s47 = sphi 0, %s31
      %s51 = sphi 0, %s51
      %s53 = sphi 0, %s51
      %s54 = sphi 0, %s53
      %s68 = sphi 0, %s54
      %s72 = sphi 0, %s72
      %s74 = sphi 0, %s72
      %s75 = sphi 0, %s74
      %s89 = sphi 0, %s75
      %s93 = sphi 0, %s93
      %s95 = sphi 0, %s93
      %s96 = sphi 0, %s95
      %s110 = sphi 0, %s96
      %s114 = sphi 0, %s114
      %s116 = sphi 0, %s114
      %s117 = sphi 0, %s116
      %s131 = sphi 0, %s117
      %s135 = sphi 0, %s135
      %s137 = sphi 0, %s135
      %s138 = sphi 0, %s137
      %s152 = sphi 0, %s138
      %s156 = sphi 0, %s156
      %s158 = sphi 0, %s156
      %s159 = sphi 0, %s158
      %s173 = sphi 0, %s159
      %s177 = sphi 0, %s177
      %s179 = sphi 0, %s177
      %s180 = sphi 0, %s179
      %s194 = sphi 0, %s180
      %s198 = sphi 0, %s198
      %s200 = sphi 0, %s198
      %s201 = sphi 0, %s200
      %s215 = sphi 0, %s201
      %s221 = sphi 0, %s223
      %s224 = sphi 0, %s221
      %s225 = sphi 0, %s224
      %s241 = sphi 0, %s225
    $region4: #{msnet_forward_padded.1} parent=1 // loop_header_branch
      %20 = sbr.rel (%p18) target = $region8
    $region5: #{msnet_forward_padded.1} parent=1 // loop_body
      %s22 = ssub.s32 %s17, 1
      %s23 = ssub.s32 %s17, 2
      %s24 = sadd.s32 %s17, 1
      %s25 = ssub.s32 %s17, %s24
      %p26 = scmp.eq.s32.totalorder %s25, 0
      %s28 = sadd.s32 %s27, 1
      %s29 = scalar_select %p26, %s27, %s28
      %p32 = pneg %p26
      %p33 = scmp.eq.s32.totalorder %s17, 1
      %p34 = por %p32, %p33
      %p35 = scmp.ne.s32.totalorder %s27, %s30
      %p36 = scmp.eq.s32.totalorder %s17, 0
      %p37 = por %p35, %p36
      %p38 = scmp.ne.s32.totalorder %s27, %s30
      %p39 = scmp.eq.s32.totalorder %s22, 1
      %p40 = por %p38, %p39
      %p41 = scmp.ne.s32.totalorder %s30, %s31
      %p42 = scmp.eq.s32.totalorder %s22, 0
      %p43 = por %p41, %p42
      %p44 = scmp.ne.s32.totalorder %s30, %s31
      %p45 = scmp.eq.s32.totalorder %s23, 1
      %p46 = por %p44, %p45
      %p48 = scmp.ne.s32.totalorder %s31, %s47
      %p49 = scmp.eq.s32.totalorder %s23, 0
      %p50 = por %p48, %p49
      %s52 = sadd.s32 %s51, 1
      %p55 = scmp.eq.s32.totalorder %s17, 1
      %p56 = scmp.ne.s32.totalorder %s51, %s53
      %p57 = scmp.eq.s32.totalorder %s17, 0
      %p58 = por %p56, %p57
      %p59 = scmp.ne.s32.totalorder %s51, %s53
      %p60 = scmp.eq.s32.totalorder %s22, 1
      %p61 = por %p59, %p60
      %p62 = scmp.ne.s32.totalorder %s53, %s54
      %p63 = scmp.eq.s32.totalorder %s22, 0
      %p64 = por %p62, %p63
      %p65 = scmp.ne.s32.totalorder %s53, %s54
      %p66 = scmp.eq.s32.totalorder %s23, 1
      %p67 = por %p65, %p66
      %p69 = scmp.ne.s32.totalorder %s54, %s68
      %p70 = scmp.eq.s32.totalorder %s23, 0
      %p71 = por %p69, %p70
      %s73 = sadd.s32 %s72, 1
      %p76 = scmp.eq.s32.totalorder %s17, 1
      %p77 = scmp.ne.s32.totalorder %s72, %s74
      %p78 = scmp.eq.s32.totalorder %s17, 0
      %p79 = por %p77, %p78
      %p80 = scmp.ne.s32.totalorder %s72, %s74
      %p81 = scmp.eq.s32.totalorder %s22, 1
      %p82 = por %p80, %p81
      %p83 = scmp.ne.s32.totalorder %s74, %s75
      %p84 = scmp.eq.s32.totalorder %s22, 0
      %p85 = por %p83, %p84
      %p86 = scmp.ne.s32.totalorder %s74, %s75
      %p87 = scmp.eq.s32.totalorder %s23, 1
      %p88 = por %p86, %p87
      %p90 = scmp.ne.s32.totalorder %s75, %s89
      %p91 = scmp.eq.s32.totalorder %s23, 0
      %p92 = por %p90, %p91
      %s94 = sadd.s32 %s93, 1
      %p97 = scmp.eq.s32.totalorder %s17, 1
      %p98 = scmp.ne.s32.totalorder %s93, %s95
      %p99 = scmp.eq.s32.totalorder %s17, 0
      %p100 = por %p98, %p99
      %p101 = scmp.ne.s32.totalorder %s93, %s95
      %p102 = scmp.eq.s32.totalorder %s22, 1
      %p103 = por %p101, %p102
      %p104 = scmp.ne.s32.totalorder %s95, %s96
      %p105 = scmp.eq.s32.totalorder %s22, 0
      %p106 = por %p104, %p105
      %p107 = scmp.ne.s32.totalorder %s95, %s96
      %p108 = scmp.eq.s32.totalorder %s23, 1
      %p109 = por %p107, %p108
      %p111 = scmp.ne.s32.totalorder %s96, %s110
      %p112 = scmp.eq.s32.totalorder %s23, 0
      %p113 = por %p111, %p112
      %s115 = sadd.s32 %s114, 1
      %p118 = scmp.eq.s32.totalorder %s17, 1
      %p119 = scmp.ne.s32.totalorder %s114, %s116
      %p120 = scmp.eq.s32.totalorder %s17, 0
      %p121 = por %p119, %p120
      %p122 = scmp.ne.s32.totalorder %s114, %s116
      %p123 = scmp.eq.s32.totalorder %s22, 1
      %p124 = por %p122, %p123
      %p125 = scmp.ne.s32.totalorder %s116, %s117
      %p126 = scmp.eq.s32.totalorder %s22, 0
      %p127 = por %p125, %p126
      %p128 = scmp.ne.s32.totalorder %s116, %s117
      %p129 = scmp.eq.s32.totalorder %s23, 1
      %p130 = por %p128, %p129
      %p132 = scmp.ne.s32.totalorder %s117, %s131
      %p133 = scmp.eq.s32.totalorder %s23, 0
      %p134 = por %p132, %p133
      %s136 = sadd.s32 %s135, 1
      %p139 = scmp.eq.s32.totalorder %s17, 1
      %p140 = scmp.ne.s32.totalorder %s135, %s137
      %p141 = scmp.eq.s32.totalorder %s17, 0
      %p142 = por %p140, %p141
      %p143 = scmp.ne.s32.totalorder %s135, %s137
      %p144 = scmp.eq.s32.totalorder %s22, 1
      %p145 = por %p143, %p144
      %p146 = scmp.ne.s32.totalorder %s137, %s138
      %p147 = scmp.eq.s32.totalorder %s22, 0
      %p148 = por %p146, %p147
      %p149 = scmp.ne.s32.totalorder %s137, %s138
      %p150 = scmp.eq.s32.totalorder %s23, 1
      %p151 = por %p149, %p150
      %p153 = scmp.ne.s32.totalorder %s138, %s152
      %p154 = scmp.eq.s32.totalorder %s23, 0
      %p155 = por %p153, %p154
      %s157 = sadd.s32 %s156, 1
      %p160 = scmp.eq.s32.totalorder %s17, 1
      %p161 = scmp.ne.s32.totalorder %s156, %s158
      %p162 = scmp.eq.s32.totalorder %s17, 0
      %p163 = por %p161, %p162
      %p164 = scmp.ne.s32.totalorder %s156, %s158
      %p165 = scmp.eq.s32.totalorder %s22, 1
      %p166 = por %p164, %p165
      %p167 = scmp.ne.s32.totalorder %s158, %s159
      %p168 = scmp.eq.s32.totalorder %s22, 0
      %p169 = por %p167, %p168
      %p170 = scmp.ne.s32.totalorder %s158, %s159
      %p171 = scmp.eq.s32.totalorder %s23, 1
      %p172 = por %p170, %p171
      %p174 = scmp.ne.s32.totalorder %s159, %s173
      %p175 = scmp.eq.s32.totalorder %s23, 0
      %p176 = por %p174, %p175
      %s178 = sadd.s32 %s177, 1
      %p181 = scmp.eq.s32.totalorder %s17, 1
      %p182 = scmp.ne.s32.totalorder %s177, %s179
      %p183 = scmp.eq.s32.totalorder %s17, 0
      %p184 = por %p182, %p183
      %p185 = scmp.ne.s32.totalorder %s177, %s179
      %p186 = scmp.eq.s32.totalorder %s22, 1
      %p187 = por %p185, %p186
      %p188 = scmp.ne.s32.totalorder %s179, %s180
      %p189 = scmp.eq.s32.totalorder %s22, 0
      %p190 = por %p188, %p189
      %p191 = scmp.ne.s32.totalorder %s179, %s180
      %p192 = scmp.eq.s32.totalorder %s23, 1
      %p193 = por %p191, %p192
      %p195 = scmp.ne.s32.totalorder %s180, %s194
      %p196 = scmp.eq.s32.totalorder %s23, 0
      %p197 = por %p195, %p196
      %s199 = sadd.s32 %s198, 1
      %p202 = scmp.eq.s32.totalorder %s17, 1
      %p203 = scmp.ne.s32.totalorder %s198, %s200
      %p204 = scmp.eq.s32.totalorder %s17, 0
      %p205 = por %p203, %p204
      %p206 = scmp.ne.s32.totalorder %s198, %s200
      %p207 = scmp.eq.s32.totalorder %s22, 1
      %p208 = por %p206, %p207
      %p209 = scmp.ne.s32.totalorder %s200, %s201
      %p210 = scmp.eq.s32.totalorder %s22, 0
      %p211 = por %p209, %p210
      %p212 = scmp.ne.s32.totalorder %s200, %s201
      %p213 = scmp.eq.s32.totalorder %s23, 1
      %p214 = por %p212, %p213
      %p216 = scmp.ne.s32.totalorder %s201, %s215
      %p217 = scmp.eq.s32.totalorder %s23, 0
      %p218 = por %p216, %p217
      %s219 = ssub.s32 %s17, %s24
      %p220 = scmp.eq.s32.totalorder %s219, 0
      %s222 = sadd.s32 %s221, 1
      %s223 = scalar_select %p220, %s221, %s222
      %p226 = pneg %p220
      %p227 = scmp.eq.s32.totalorder %s17, 1
      %p228 = por %p226, %p227
      %p229 = scmp.ne.s32.totalorder %s221, %s224
      %p230 = scmp.eq.s32.totalorder %s17, 0
      %p231 = por %p229, %p230
      %p232 = scmp.ne.s32.totalorder %s221, %s224
      %p233 = scmp.eq.s32.totalorder %s22, 1
      %p234 = por %p232, %p233
      %p235 = scmp.ne.s32.totalorder %s224, %s225
      %p236 = scmp.eq.s32.totalorder %s22, 0
      %p237 = por %p235, %p236
      %p238 = scmp.ne.s32.totalorder %s224, %s225
      %p239 = scmp.eq.s32.totalorder %s23, 1
      %p240 = por %p238, %p239
      %p242 = scmp.ne.s32.totalorder %s225, %s241
      %p243 = scmp.eq.s32.totalorder %s23, 0
      %p244 = por %p242, %p243
      %p245 = scmp.le.s32.totalorder 1, %s17
      %p246 = scmp.lt.s32.totalorder %s17, 3
      %p247 = pnand %p245, %p246
      %p248 = pneg %p247
      // Predicated region
      $region9: #{msnet_forward_padded.1} parent=5 // pred_check
        _
      $region10: #{msnet_forward_padded.1} parent=5 // pred_check_branch
        %250 = sbr.rel (%p247) target = $region12
      $region11: #{msnet_forward_padded.1} parent=5 // pred_region
        %s251 = ssub.s32 %s17, 1
        // Predicated region
        $region13: #{msnet_forward_padded.1} parent=11 // pred_check
          %p252 = pneg %p64
        $region14: #{msnet_forward_padded.1} parent=11 // pred_check_branch
          %254 = sbr.rel (%p252) target = $region16
        $region15: #{msnet_forward_padded.1} parent=11 // pred_region
          _
        $region16: #{msnet_forward_padded.1} parent=11 // pred_fallthru
          _
        // Predicated region
        $region17: #{msnet_forward_padded.1} parent=11 // pred_check
          %p255 = pneg %p85
        $region18: #{msnet_forward_padded.1} parent=11 // pred_check_branch
          %257 = sbr.rel (%p255) target = $region20
        $region19: #{msnet_forward_padded.1} parent=11 // pred_region
          _
        $region20: #{msnet_forward_padded.1} parent=11 // pred_fallthru
          _
        // Predicated region
        $region21: #{msnet_forward_padded.1} parent=11 // pred_check
          %p258 = pneg %p106
        $region22: #{msnet_forward_padded.1} parent=11 // pred_check_branch
          %260 = sbr.rel (%p258) target = $region24
        $region23: #{msnet_forward_padded.1} parent=11 // pred_region
          _
        $region24: #{msnet_forward_padded.1} parent=11 // pred_fallthru
          _
        // Predicated region
        $region25: #{msnet_forward_padded.1} parent=11 // pred_check
          %p261 = pneg %p127
        $region26: #{msnet_forward_padded.1} parent=11 // pred_check_branch
          %263 = sbr.rel (%p261) target = $region28
        $region27: #{msnet_forward_padded.1} parent=11 // pred_region
          _
        $region28: #{msnet_forward_padded.1} parent=11 // pred_fallthru
          _
        // Predicated region
        $region29: #{msnet_forward_padded.1} parent=11 // pred_check
          %p264 = pneg %p148
        $region30: #{msnet_forward_padded.1} parent=11 // pred_check_branch
          %266 = sbr.rel (%p264) target = $region32
        $region31: #{msnet_forward_padded.1} parent=11 // pred_region
          %s268 = ssub.s32 1024, 1024
          %269 = vsyncadd [#allocation3], %s268
          %s270 = sshll.u32 [#allocation2], 4
          %s271 = int_to_ptr.vmem [resolvable:$true] %s270
          %276 = dma.hbm_to_vmem [thread:$0]  %s5, 1024, %s271, [#allocation3], 64, 64, 4
        $region32: #{msnet_forward_padded.1} parent=11 // pred_fallthru
          _
        // Predicated region
        $region33: #{msnet_forward_padded.1} parent=11 // pred_check
          %p277 = pneg %p169
        $region34: #{msnet_forward_padded.1} parent=11 // pred_check_branch
          %279 = sbr.rel (%p277) target = $region36
        $region35: #{msnet_forward_padded.1} parent=11 // pred_region
          _
        $region36: #{msnet_forward_padded.1} parent=11 // pred_fallthru
          _
        // Predicated region
        $region37: #{msnet_forward_padded.1} parent=11 // pred_check
          %p280 = pneg %p190
        $region38: #{msnet_forward_padded.1} parent=11 // pred_check_branch
          %282 = sbr.rel (%p280) target = $region40
        $region39: #{msnet_forward_padded.1} parent=11 // pred_region
          %s284 = ssub.s32 1024, 1024
          %285 = vsyncadd [#allocation5], %s284
          %s286 = sshll.u32 [#allocation4], 4
          %s287 = int_to_ptr.vmem [resolvable:$true] %s286
          %292 = dma.hbm_to_vmem [thread:$0]  %s7, 1024, %s287, [#allocation5], 64, 64, 4
        $region40: #{msnet_forward_padded.1} parent=11 // pred_fallthru
          _
        // Predicated region
        $region41: #{msnet_forward_padded.1} parent=11 // pred_check
          %p293 = pneg %p211
        $region42: #{msnet_forward_padded.1} parent=11 // pred_check_branch
          %295 = sbr.rel (%p293) target = $region44
        $region43: #{msnet_forward_padded.1} parent=11 // pred_region
          _
        $region44: #{msnet_forward_padded.1} parent=11 // pred_fallthru
          _
      $region12: #{msnet_forward_padded.1} parent=5 // pred_fallthru
        _
      %p296 = scmp.lt.s32.totalorder %s17, 2
      // Predicated region
      $region45: #{msnet_forward_padded.1} parent=5 // pred_check
        %p297 = pneg %p296
      $region46: #{msnet_forward_padded.1} parent=5 // pred_check_branch
        %299 = sbr.rel (%p297) target = $region48
      $region47: #{msnet_forward_padded.1} parent=5 // pred_region
        // Predicated region
        $region49: #{msnet_forward_padded.1} parent=47 // pred_check
          %p300 = pneg %p37
        $region50: #{msnet_forward_padded.1} parent=47 // pred_check_branch
          %302 = sbr.rel (%p300) target = $region52
        $region51: #{msnet_forward_padded.1} parent=47 // pred_region
          %s303 = smul.u32 4, %s17
          %p304 = scmp.lt.s32.totalorder %s303, 7
          %s305 = scalar_select %p304, %s303, 7
          %s306 = smul.addr %s305, 8
          %s307 = scalar_lea.vmem %s0, %s306
          %s308 = smul.u32 4, %s17
        $region52: #{msnet_forward_padded.1} parent=47 // pred_fallthru
          _
      $region48: #{msnet_forward_padded.1} parent=5 // pred_fallthru
        _
      %p309 = scmp.le.s32.totalorder 1, %s17
      %p310 = scmp.lt.s32.totalorder %s17, 3
      %p311 = pnand %p309, %p310
      %p312 = pneg %p311
      // Predicated region
      $region53: #{msnet_forward_padded.1} parent=5 // pred_check
        _
      $region54: #{msnet_forward_padded.1} parent=5 // pred_check_branch
        %314 = sbr.rel (%p311) target = $region56
      $region55: #{msnet_forward_padded.1} parent=5 // pred_region
        %s315 = ssub.s32 %s17, 1
        // Predicated region
        $region57: #{msnet_forward_padded.1} parent=55 // pred_check
          %p316 = pneg %p148
        $region58: #{msnet_forward_padded.1} parent=55 // pred_check_branch
          %318 = sbr.rel (%p316) target = $region60
        $region59: #{msnet_forward_padded.1} parent=55 // pred_region
          %319 = dma.done [#allocation3], 1024
        $region60: #{msnet_forward_padded.1} parent=55 // pred_fallthru
          _
        // Predicated region
        $region61: #{msnet_forward_padded.1} parent=55 // pred_check
          %p320 = pneg %p190
        $region62: #{msnet_forward_padded.1} parent=55 // pred_check_branch
          %322 = sbr.rel (%p320) target = $region64
        $region63: #{msnet_forward_padded.1} parent=55 // pred_region
          %323 = dma.done [#allocation5], 1024
        $region64: #{msnet_forward_padded.1} parent=55 // pred_fallthru
          _
        %s324 = smul.u32 4, %s22
        %p325 = scmp.lt.s32.totalorder %s324, 7
        %s326 = scalar_select %p325, %s324, 7
        %s327 = smul.addr %s326, 8
        %s328 = scalar_lea.vmem %s0, %s327
        %p329 = pneg %p43
        %p330 = pneg %p40
        %p331 = pneg %p64
        %p332 = pneg %p61
        %p333 = pneg %p85
        %p334 = pneg %p82
        %p335 = pneg %p106
        %p336 = pneg %p103
        %p337 = pneg %p127
        %p338 = pneg %p124
        %p339 = pneg %p148
        %p340 = pneg %p145
        %p341 = pneg %p169
        %p342 = pneg %p166
        %p343 = pneg %p190
        %p344 = pneg %p187
        %p345 = pneg %p211
        %p346 = pneg %p208
        %p347 = pneg %p237
        %p348 = pneg %p234
        %s349 = smul.u32 4, %s22
        %p350 = scmp.lt.s32.totalorder %s349, 7
        %s351 = scalar_select %p350, %s349, 7
        %s352 = smul.addr %s351, 4
        %s353 = scalar_lea.vmem %s9, %s352
        %s354 = smul.u32 4, %s22
        %p355 = scmp.lt.s32.totalorder %s354, 7
        %s356 = scalar_select %p355, %s354, 7
        %s357 = smul.addr %s356, 8
        %s358 = scalar_lea.vmem %s0, %s357
        %s359 = smul.u32 4, %s22
        %s360 = smul.u32 4, %s22
        %p361 = scmp.lt.s32.totalorder %s360, 7
        %s362 = scalar_select %p361, %s360, 7
        %s363 = smul.addr %s362, 4
        %s364 = scalar_lea.vmem %s9, %s363
        %s365 = smul.u32 4, %s22
        %v367 = vld [vmem:[%s358] sm:$0xff]
        %v368 = vld [vmem:[%s358 + $0x8] sm:$0xff]
        %v369 = vld [vmem:[%s358 + $0x10] sm:$0xff]
        %v370 = vld [vmem:[%s358 + $0x18] sm:$0xff]
        %v371 = vpack.c.bf16 %v368, %v367
        %v372 = vpack.c.bf16 %v370, %v369
        %v373 = vld [vmem:[%s1] sm:$0xf]
        %v374 = vld [vmem:[%s1 + $0x4] sm:$0xf]
        %v375 = vld [vmem:[%s1 + $0x8] sm:$0xf]
        %v376 = vld [vmem:[%s1 + $0xc] sm:$0xf]
        %v377 = vld [vmem:[%s2] sm:$0x1]
        %v379 = vlaneseq
        %v380 = vshrl.u32 %v379, 7
        %v381 = vsub.s32 0, %v380
        %v382 = vrot.slane %v377, %v381
        %v388 = vunpack.c.l.b16 %v373
        %v389 = vunpack.c.l.b16 %v374
        %v390 = vunpack.c.l.b16 %v375
        %v391 = vunpack.c.l.b16 %v376
        %v392 = vpack.c.b16 %v389, %v388
        %v393 = vpack.c.b16 %v391, %v390
        %vm396 = vcmask 261120
        %v398 = vsel %vm396, %v371, 0
        %v401 = vsel %vm396, %v372, 0
        %403 = vmatprep.subr.bf16.mxu0 0
        %404 = vmatpush1.bf16.msra.mxu0 %v392
        %405 = vmatprep.subr.bf16.mxu0 0
        %406 = vmatpush1.bf16.msra.mxu0 %v393
        %407 = vmatprep.subr.bf16.mxu0 0
        %408 = vmatpush1.bf16.msra.mxu0 0
        %409 = vmatprep.subr.bf16.mxu0 0
        %410 = vmatpush1.bf16.msra.mxu0 0
        %411 = vmatprep.subr.bf16.mxu0 0
        %412 = vmatpush1.bf16.msra.mxu0 0
        %413 = vmatprep.subr.bf16.mxu0 0
        %414 = vmatpush1.bf16.msra.mxu0 0
        %415 = vmatprep.subr.bf16.mxu0 0
        %416 = vmatpush1.bf16.msra.mxu0 0
        %417 = vmatprep.subr.bf16.mxu0 0
        %418 = vmatpush1.bf16.msra.mxu0 0
        %419 = vmatprep.subr.bf16.mxu0 0
        %420 = vmatpush1.bf16.msra.mxu0 0
        %421 = vmatprep.subr.bf16.mxu0 0
        %422 = vmatpush1.bf16.msra.mxu0 0
        %423 = vmatprep.subr.bf16.mxu0 0
        %424 = vmatpush1.bf16.msra.mxu0 0
        %425 = vmatprep.subr.bf16.mxu0 0
        %426 = vmatpush1.bf16.msra.mxu0 0
        %427 = vmatprep.subr.bf16.mxu0 0
        %428 = vmatpush1.bf16.msra.mxu0 0
        %429 = vmatprep.subr.bf16.mxu0 0
        %430 = vmatpush1.bf16.msra.mxu0 0
        %431 = vmatprep.subr.bf16.mxu0 0
        %432 = vmatpush1.bf16.msra.mxu0 0
        %433 = vmatprep.subr.bf16.mxu0 0
        %434 = vmatpush1.bf16.msra.mxu0 0
        %435 = vmatprep.mubr.bf16.mxu0 0
        %436 = vmatmul.mubr.bf16.gmra.mrb[0].mxu0 %v398
        %v437 = vpop.f32.mrb[0].mxu0
        %v438 = vadd.f32 %v382, %v437
        %v439 = vpop.f32.mrb[0].mxu0
        %v440 = vpop.f32.mrb[0].mxu0
        %v441 = vadd.f32 %v382, %v440
        %v442 = vpop.f32.mrb[0].mxu0
        %443 = vmatprep.mubr.bf16.mxu0 0
        %444 = vmatmul.mubr.bf16.gmra.mrb[0].mxu0 %v401
        %v445 = vpop.f32.mrb[0].mxu0
        %v446 = vadd.f32 %v382, %v445
        %v447 = vpop.f32.mrb[0].mxu0
        %v448 = vpop.f32.mrb[0].mxu0
        %v449 = vadd.f32 %v382, %v448
        %v450 = vpop.f32.mrb[0].mxu0
        %451 = vdwg.mxu0
        %v452 = vmax.f32 %v438, 0.0
        %v453 = vmax.f32 %v441, 0.0
        %v454 = vmax.f32 %v446, 0.0
        %v455 = vmax.f32 %v449, 0.0
        %v456 = vpack.c.bf16 %v453, %v452
        %v457 = vpack.c.bf16 %v455, %v454
        %v458 = vld [vmem:[%s3] sm:$0xf]
        %v459 = vld [vmem:[%s3 + $0x4] sm:$0xf]
        %v460 = vld [vmem:[%s3 + $0x8] sm:$0xf]
        %v461 = vld [vmem:[%s3 + $0xc] sm:$0xf]
        %v462 = vld [vmem:[%s3 + $0x10] sm:$0xf]
        %v463 = vld [vmem:[%s3 + $0x14] sm:$0xf]
        %v464 = vld [vmem:[%s3 + $0x18] sm:$0xf]
        %v465 = vld [vmem:[%s3 + $0x1c] sm:$0xf]
        %v466 = vld [vmem:[%s3 + $0x20] sm:$0xf]
        %v467 = vld [vmem:[%s3 + $0x24] sm:$0xf]
        %v468 = vld [vmem:[%s3 + $0x28] sm:$0xf]
        %v469 = vld [vmem:[%s3 + $0x2c] sm:$0xf]
        %v470 = vld [vmem:[%s3 + $0x30] sm:$0xf]
        %v471 = vld [vmem:[%s3 + $0x34] sm:$0xf]
        %v472 = vld [vmem:[%s3 + $0x38] sm:$0xf]
        %v473 = vld [vmem:[%s3 + $0x3c] sm:$0xf]
        %v474 = vld [vmem:[%s4] sm:$0x1]
        %v476 = vlaneseq
        %v477 = vshrl.u32 %v476, 7
        %v478 = vsub.s32 0, %v477
        %v479 = vrot.slane %v474, %v478
        %v497 = vunpack.c.l.b16 %v458
        %v498 = vunpack.c.l.b16 %v459
        %v499 = vunpack.c.l.b16 %v460
        %v500 = vunpack.c.l.b16 %v461
        %v501 = vunpack.c.l.b16 %v462
        %v502 = vunpack.c.l.b16 %v463
        %v503 = vunpack.c.l.b16 %v464
        %v504 = vunpack.c.l.b16 %v465
        %v505 = vunpack.c.l.b16 %v466
        %v506 = vunpack.c.l.b16 %v467
        %v507 = vunpack.c.l.b16 %v468
        %v508 = vunpack.c.l.b16 %v469
        %v509 = vunpack.c.l.b16 %v470
        %v510 = vunpack.c.l.b16 %v471
        %v511 = vunpack.c.l.b16 %v472
        %v512 = vunpack.c.l.b16 %v473
        %v513 = vpack.c.b16 %v498, %v497
        %v514 = vpack.c.b16 %v500, %v499
        %v515 = vpack.c.b16 %v502, %v501
        %v516 = vpack.c.b16 %v504, %v503
        %v517 = vpack.c.b16 %v506, %v505
        %v518 = vpack.c.b16 %v508, %v507
        %v519 = vpack.c.b16 %v510, %v509
        %v520 = vpack.c.b16 %v512, %v511
        %529 = vmatprep.subr.bf16.mxu0 0
        %530 = vmatpush1.bf16.msra.mxu0 %v513
        %531 = vmatprep.subr.bf16.mxu0 0
        %532 = vmatpush1.bf16.msra.mxu0 %v514
        %533 = vmatprep.subr.bf16.mxu0 0
        %534 = vmatpush1.bf16.msra.mxu0 %v515
        %535 = vmatprep.subr.bf16.mxu0 0
        %536 = vmatpush1.bf16.msra.mxu0 %v516
        %537 = vmatprep.subr.bf16.mxu0 0
        %538 = vmatpush1.bf16.msra.mxu0 %v517
        %539 = vmatprep.subr.bf16.mxu0 0
        %540 = vmatpush1.bf16.msra.mxu0 %v518
        %541 = vmatprep.subr.bf16.mxu0 0
        %542 = vmatpush1.bf16.msra.mxu0 %v519
        %543 = vmatprep.subr.bf16.mxu0 0
        %544 = vmatpush1.bf16.msra.mxu0 %v520
        %545 = vmatprep.subr.bf16.mxu0 0
        %546 = vmatpush1.bf16.msra.mxu0 0
        %547 = vmatprep.subr.bf16.mxu0 0
        %548 = vmatpush1.bf16.msra.mxu0 0
        %549 = vmatprep.subr.bf16.mxu0 0
        %550 = vmatpush1.bf16.msra.mxu0 0
        %551 = vmatprep.subr.bf16.mxu0 0
        %552 = vmatpush1.bf16.msra.mxu0 0
        %553 = vmatprep.subr.bf16.mxu0 0
        %554 = vmatpush1.bf16.msra.mxu0 0
        %555 = vmatprep.subr.bf16.mxu0 0
        %556 = vmatpush1.bf16.msra.mxu0 0
        %557 = vmatprep.subr.bf16.mxu0 0
        %558 = vmatpush1.bf16.msra.mxu0 0
        %559 = vmatprep.subr.bf16.mxu0 0
        %560 = vmatpush1.bf16.msra.mxu0 0
        %561 = vmatprep.mubr.bf16.mxu0 0
        %562 = vmatmul.mubr.bf16.gmra.mrb[0].mxu0 %v456
        %v563 = vpop.f32.mrb[0].mxu0
        %v564 = vadd.f32 %v479, %v563
        %v565 = vpop.f32.mrb[0].mxu0
        %v566 = vpop.f32.mrb[0].mxu0
        %v567 = vadd.f32 %v479, %v566
        %v568 = vpop.f32.mrb[0].mxu0
        %569 = vmatprep.mubr.bf16.mxu0 0
        %570 = vmatmul.mubr.bf16.gmra.mrb[0].mxu0 %v457
        %v571 = vpop.f32.mrb[0].mxu0
        %v572 = vadd.f32 %v479, %v571
        %v573 = vpop.f32.mrb[0].mxu0
        %v574 = vpop.f32.mrb[0].mxu0
        %v575 = vadd.f32 %v479, %v574
        %v576 = vpop.f32.mrb[0].mxu0
        %577 = vdwg.mxu0
        %v578 = vmax.f32 %v564, 0.0
        %v579 = vmax.f32 %v567, 0.0
        %v580 = vmax.f32 %v572, 0.0
        %v581 = vmax.f32 %v575, 0.0
        %v582 = vpack.c.bf16 %v579, %v578
        %v583 = vpack.c.bf16 %v581, %v580
        %v584 = vld [vmem:[#allocation2] sm:$0xf]
        %v585 = vld [vmem:[#allocation2 + $0x4] sm:$0xf]
        %v586 = vld [vmem:[#allocation2 + $0x8] sm:$0xf]
        %v587 = vld [vmem:[#allocation2 + $0xc] sm:$0xf]
        %v588 = vld [vmem:[#allocation2 + $0x10] sm:$0xf]
        %v589 = vld [vmem:[#allocation2 + $0x14] sm:$0xf]
        %v590 = vld [vmem:[#allocation2 + $0x18] sm:$0xf]
        %v591 = vld [vmem:[#allocation2 + $0x1c] sm:$0xf]
        %v592 = vld [vmem:[#allocation2 + $0x20] sm:$0xf]
        %v593 = vld [vmem:[#allocation2 + $0x24] sm:$0xf]
        %v594 = vld [vmem:[#allocation2 + $0x28] sm:$0xf]
        %v595 = vld [vmem:[#allocation2 + $0x2c] sm:$0xf]
        %v596 = vld [vmem:[#allocation2 + $0x30] sm:$0xf]
        %v597 = vld [vmem:[#allocation2 + $0x34] sm:$0xf]
        %v598 = vld [vmem:[#allocation2 + $0x38] sm:$0xf]
        %v599 = vld [vmem:[#allocation2 + $0x3c] sm:$0xf]
        %v600 = vld [vmem:[%s6] sm:$0x1]
        %v602 = vlaneseq
        %v603 = vshrl.u32 %v602, 7
        %v604 = vsub.s32 0, %v603
        %v605 = vrot.slane %v600, %v604
        %v623 = vunpack.c.l.b16 %v584
        %v624 = vunpack.c.l.b16 %v585
        %v625 = vunpack.c.l.b16 %v586
        %v626 = vunpack.c.l.b16 %v587
        %v627 = vunpack.c.l.b16 %v588
        %v628 = vunpack.c.l.b16 %v589
        %v629 = vunpack.c.l.b16 %v590
        %v630 = vunpack.c.l.b16 %v591
        %v631 = vunpack.c.l.b16 %v592
        %v632 = vunpack.c.l.b16 %v593
        %v633 = vunpack.c.l.b16 %v594
        %v634 = vunpack.c.l.b16 %v595
        %v635 = vunpack.c.l.b16 %v596
        %v636 = vunpack.c.l.b16 %v597
        %v637 = vunpack.c.l.b16 %v598
        %v638 = vunpack.c.l.b16 %v599
        %v639 = vpack.c.b16 %v624, %v623
        %v640 = vpack.c.b16 %v626, %v625
        %v641 = vpack.c.b16 %v628, %v627
        %v642 = vpack.c.b16 %v630, %v629
        %v643 = vpack.c.b16 %v632, %v631
        %v644 = vpack.c.b16 %v634, %v633
        %v645 = vpack.c.b16 %v636, %v635
        %v646 = vpack.c.b16 %v638, %v637
        %655 = vmatprep.subr.bf16.mxu0 0
        %656 = vmatpush1.bf16.msra.mxu0 %v639
        %657 = vmatprep.subr.bf16.mxu0 0
        %658 = vmatpush1.bf16.msra.mxu0 %v640
        %659 = vmatprep.subr.bf16.mxu0 0
        %660 = vmatpush1.bf16.msra.mxu0 %v641
        %661 = vmatprep.subr.bf16.mxu0 0
        %662 = vmatpush1.bf16.msra.mxu0 %v642
        %663 = vmatprep.subr.bf16.mxu0 0
        %664 = vmatpush1.bf16.msra.mxu0 %v643
        %665 = vmatprep.subr.bf16.mxu0 0
        %666 = vmatpush1.bf16.msra.mxu0 %v644
        %667 = vmatprep.subr.bf16.mxu0 0
        %668 = vmatpush1.bf16.msra.mxu0 %v645
        %669 = vmatprep.subr.bf16.mxu0 0
        %670 = vmatpush1.bf16.msra.mxu0 %v646
        %671 = vmatprep.subr.bf16.mxu0 0
        %672 = vmatpush1.bf16.msra.mxu0 0
        %673 = vmatprep.subr.bf16.mxu0 0
        %674 = vmatpush1.bf16.msra.mxu0 0
        %675 = vmatprep.subr.bf16.mxu0 0
        %676 = vmatpush1.bf16.msra.mxu0 0
        %677 = vmatprep.subr.bf16.mxu0 0
        %678 = vmatpush1.bf16.msra.mxu0 0
        %679 = vmatprep.subr.bf16.mxu0 0
        %680 = vmatpush1.bf16.msra.mxu0 0
        %681 = vmatprep.subr.bf16.mxu0 0
        %682 = vmatpush1.bf16.msra.mxu0 0
        %683 = vmatprep.subr.bf16.mxu0 0
        %684 = vmatpush1.bf16.msra.mxu0 0
        %685 = vmatprep.subr.bf16.mxu0 0
        %686 = vmatpush1.bf16.msra.mxu0 0
        %687 = vmatprep.mubr.bf16.mxu0 0
        %688 = vmatmul.mubr.bf16.gmra.mrb[0].mxu0 %v582
        %v689 = vpop.f32.mrb[0].mxu0
        %v690 = vadd.f32 %v605, %v689
        %v691 = vpop.f32.mrb[0].mxu0
        %v692 = vpop.f32.mrb[0].mxu0
        %v693 = vadd.f32 %v605, %v692
        %v694 = vpop.f32.mrb[0].mxu0
        %695 = vmatprep.mubr.bf16.mxu0 0
        %696 = vmatmul.mubr.bf16.gmra.mrb[0].mxu0 %v583
        %v697 = vpop.f32.mrb[0].mxu0
        %v698 = vadd.f32 %v605, %v697
        %v699 = vpop.f32.mrb[0].mxu0
        %v700 = vpop.f32.mrb[0].mxu0
        %v701 = vadd.f32 %v605, %v700
        %v702 = vpop.f32.mrb[0].mxu0
        %703 = vdwg.mxu0
        %v704 = vmax.f32 %v690, 0.0
        %v705 = vmax.f32 %v693, 0.0
        %v706 = vmax.f32 %v698, 0.0
        %v707 = vmax.f32 %v701, 0.0
        %v708 = vpack.c.bf16 %v705, %v704
        %v709 = vpack.c.bf16 %v707, %v706
        %v710 = vld [vmem:[#allocation4] sm:$0xf]
        %v711 = vld [vmem:[#allocation4 + $0x4] sm:$0xf]
        %v712 = vld [vmem:[#allocation4 + $0x8] sm:$0xf]
        %v713 = vld [vmem:[#allocation4 + $0xc] sm:$0xf]
        %v714 = vld [vmem:[#allocation4 + $0x10] sm:$0xf]
        %v715 = vld [vmem:[#allocation4 + $0x14] sm:$0xf]
        %v716 = vld [vmem:[#allocation4 + $0x18] sm:$0xf]
        %v717 = vld [vmem:[#allocation4 + $0x1c] sm:$0xf]
        %v718 = vld [vmem:[#allocation4 + $0x20] sm:$0xf]
        %v719 = vld [vmem:[#allocation4 + $0x24] sm:$0xf]
        %v720 = vld [vmem:[#allocation4 + $0x28] sm:$0xf]
        %v721 = vld [vmem:[#allocation4 + $0x2c] sm:$0xf]
        %v722 = vld [vmem:[#allocation4 + $0x30] sm:$0xf]
        %v723 = vld [vmem:[#allocation4 + $0x34] sm:$0xf]
        %v724 = vld [vmem:[#allocation4 + $0x38] sm:$0xf]
        %v725 = vld [vmem:[#allocation4 + $0x3c] sm:$0xf]
        %v726 = vld [vmem:[%s8] sm:$0x1]
        %v728 = vlaneseq
        %v729 = vshrl.u32 %v728, 7
        %v730 = vsub.s32 0, %v729
        %v731 = vrot.slane %v726, %v730
        %v749 = vunpack.c.l.b16 %v710
        %v750 = vunpack.c.l.b16 %v711
        %v751 = vunpack.c.l.b16 %v712
        %v752 = vunpack.c.l.b16 %v713
        %v753 = vunpack.c.l.b16 %v714
        %v754 = vunpack.c.l.b16 %v715
        %v755 = vunpack.c.l.b16 %v716
        %v756 = vunpack.c.l.b16 %v717
        %v757 = vunpack.c.l.b16 %v718
        %v758 = vunpack.c.l.b16 %v719
        %v759 = vunpack.c.l.b16 %v720
        %v760 = vunpack.c.l.b16 %v721
        %v761 = vunpack.c.l.b16 %v722
        %v762 = vunpack.c.l.b16 %v723
        %v763 = vunpack.c.l.b16 %v724
        %v764 = vunpack.c.l.b16 %v725
        %v765 = vpack.c.b16 %v750, %v749
        %v766 = vpack.c.b16 %v752, %v751
        %v767 = vpack.c.b16 %v754, %v753
        %v768 = vpack.c.b16 %v756, %v755
        %v769 = vpack.c.b16 %v758, %v757
        %v770 = vpack.c.b16 %v760, %v759
        %v771 = vpack.c.b16 %v762, %v761
        %v772 = vpack.c.b16 %v764, %v763
        %781 = vmatprep.subr.bf16.mxu0 0
        %782 = vmatpush1.bf16.msra.mxu0 %v765
        %783 = vmatprep.subr.bf16.mxu0 0
        %784 = vmatpush1.bf16.msra.mxu0 %v766
        %785 = vmatprep.subr.bf16.mxu0 0
        %786 = vmatpush1.bf16.msra.mxu0 %v767
        %787 = vmatprep.subr.bf16.mxu0 0
        %788 = vmatpush1.bf16.msra.mxu0 %v768
        %789 = vmatprep.subr.bf16.mxu0 0
        %790 = vmatpush1.bf16.msra.mxu0 %v769
        %791 = vmatprep.subr.bf16.mxu0 0
        %792 = vmatpush1.bf16.msra.mxu0 %v770
        %793 = vmatprep.subr.bf16.mxu0 0
        %794 = vmatpush1.bf16.msra.mxu0 %v771
        %795 = vmatprep.subr.bf16.mxu0 0
        %796 = vmatpush1.bf16.msra.mxu0 %v772
        %797 = vmatprep.subr.bf16.mxu0 0
        %798 = vmatpush1.bf16.msra.mxu0 0
        %799 = vmatprep.subr.bf16.mxu0 0
        %800 = vmatpush1.bf16.msra.mxu0 0
        %801 = vmatprep.subr.bf16.mxu0 0
        %802 = vmatpush1.bf16.msra.mxu0 0
        %803 = vmatprep.subr.bf16.mxu0 0
        %804 = vmatpush1.bf16.msra.mxu0 0
        %805 = vmatprep.subr.bf16.mxu0 0
        %806 = vmatpush1.bf16.msra.mxu0 0
        %807 = vmatprep.subr.bf16.mxu0 0
        %808 = vmatpush1.bf16.msra.mxu0 0
        %809 = vmatprep.subr.bf16.mxu0 0
        %810 = vmatpush1.bf16.msra.mxu0 0
        %811 = vmatprep.subr.bf16.mxu0 0
        %812 = vmatpush1.bf16.msra.mxu0 0
        %813 = vmatprep.mubr.bf16.mxu0 0
        %814 = vmatmul.mubr.bf16.gmra.mrb[0].mxu0 %v708
        %v815 = vpop.f32.mrb[0].mxu0
        %v816 = vadd.f32 %v731, %v815
        %v817 = vpop.f32.mrb[0].mxu0
        %v818 = vpop.f32.mrb[0].mxu0
        %v819 = vadd.f32 %v731, %v818
        %v820 = vpop.f32.mrb[0].mxu0
        %821 = vmatprep.mubr.bf16.mxu0 0
        %822 = vmatmul.mubr.bf16.gmra.mrb[0].mxu0 %v709
        %v823 = vpop.f32.mrb[0].mxu0
        %v824 = vadd.f32 %v731, %v823
        %v825 = vpop.f32.mrb[0].mxu0
        %v826 = vpop.f32.mrb[0].mxu0
        %v827 = vadd.f32 %v731, %v826
        %v828 = vpop.f32.mrb[0].mxu0
        %829 = vdwg.mxu0
        %v830 = vmul.f32 %v816, %v816
        %v831 = vmul.f32 %v819, %v819
        %v832 = vmul.f32 %v824, %v824
        %v833 = vmul.f32 %v827, %v827
        %834 = vadd.xlane.f32.xlu0 %v830
        %v835 = vpop.xlane.xlu0 %834
        %836 = vadd.xlane.f32.xlu0 %v831
        %v837 = vpop.xlane.xlu0 %836
        %838 = vadd.xlane.f32.xlu0 %v832
        %v839 = vpop.xlane.xlu0 %838
        %840 = vadd.xlane.f32.xlu0 %v833
        %v841 = vpop.xlane.xlu0 %840
        %v842 = vmax.f32 %v835, 1e-24
        %v843 = vmax.f32 %v837, 1e-24
        %v844 = vmax.f32 %v839, 1e-24
        %v845 = vmax.f32 %v841, 1e-24
        %v846 = vrsqrt.pop %v842
        %v847 = vrsqrt.pop %v843
        %v848 = vrsqrt.pop %v844
        %v849 = vrsqrt.pop %v845
        %v850 = vmul.f32 %v816, %v846
        %v851 = vmul.f32 %v819, %v847
        %v852 = vmul.f32 %v824, %v848
        %v853 = vmul.f32 %v827, %v849
        %v854 = vpack.c.bf16 %v851, %v850
        %v855 = vpack.c.bf16 %v853, %v852
        %v858 = vunpack.c.l.b16 %v854
        %v859 = vunpack.c.h.b16 %v854
        %v860 = vunpack.c.l.b16 %v855
        %v861 = vunpack.c.h.b16 %v855
        %v862 = vpack.c.b16 %v858, %v858
        %v863 = vpack.c.b16 %v859, %v859
        %v864 = vpack.c.b16 %v860, %v860
        %v865 = vpack.c.b16 %v861, %v861
        %870 = vst [vmem:[%s364] sm:$0xf] %v862
        %871 = vst [vmem:[%s364 + $0x4] sm:$0xf] %v863
        %872 = vst [vmem:[%s364 + $0x8] sm:$0xf] %v864
        %873 = vst [vmem:[%s364 + $0xc] sm:$0xf] %v865
        %s874 = smul.u32 4, %s22
        %p875 = scmp.lt.s32.totalorder %s874, 7
        %s876 = scalar_select %p875, %s874, 7
        %s877 = smul.addr %s876, 4
        %s878 = scalar_lea.vmem %s9, %s877
        // Predicated region
        $region65: #{msnet_forward_padded.1} parent=55 // pred_check
          %p879 = pneg %p234
        $region66: #{msnet_forward_padded.1} parent=55 // pred_check_branch
          %881 = sbr.rel (%p879) target = $region68
        $region67: #{msnet_forward_padded.1} parent=55 // pred_region
          %s882 = smul.u32 4, %s22
        $region68: #{msnet_forward_padded.1} parent=55 // pred_fallthru
          _
      $region56: #{msnet_forward_padded.1} parent=5 // pred_fallthru
        _
      %p883 = scmp.le.s32.totalorder 2, %s17
      // Predicated region
      $region69: #{msnet_forward_padded.1} parent=5 // pred_check
        %p884 = pneg %p883
      $region70: #{msnet_forward_padded.1} parent=5 // pred_check_branch
        %886 = sbr.rel (%p884) target = $region72
      $region71: #{msnet_forward_padded.1} parent=5 // pred_region
        %s887 = ssub.s32 %s17, 2
        // Predicated region
        $region73: #{msnet_forward_padded.1} parent=71 // pred_check
          %p888 = pneg %p240
        $region74: #{msnet_forward_padded.1} parent=71 // pred_check_branch
          %890 = sbr.rel (%p888) target = $region76
        $region75: #{msnet_forward_padded.1} parent=71 // pred_region
          %s891 = smul.u32 4, %s23
          %p892 = scmp.lt.s32.totalorder %s891, 7
          %s893 = scalar_select %p892, %s891, 7
          %s894 = smul.addr %s893, 4
          %s895 = scalar_lea.vmem %s9, %s894
        $region76: #{msnet_forward_padded.1} parent=71 // pred_fallthru
          _
      $region72: #{msnet_forward_padded.1} parent=5 // pred_fallthru
        _
    $region6: #{msnet_forward_padded.1} parent=1 // loop_footer
      %s21 = sadd.s32 1, %s17
    $region7: #{msnet_forward_padded.1} parent=1 // loop_footer_branch
      %16 = sbr.rel target = $region3
    $region8: #{msnet_forward_padded.1} parent=1 // loop_exit
      _
    %896 = vsyncpa [#allocation3], 1
    %s897 = scalar_lea.sflag [#allocation3], 1
    %898 = vsyncpa %s897, 1
    %899 = vsyncpa [#allocation5], 1

</llo_original>
